<compile_context>
chip_gen: v7x
topology: tpu7x:2x2x1
jax: 0.10.0
libtpu: 0.0.40
codegen_flags: <defaults>
</compile_context>

<pallas_src>
import jax
import jax.numpy as jnp
from jax.experimental import pallas as pl
from jax.experimental.pallas import tpu as pltpu

D_in, H1, H2, D_out = 4, 10, 5, 3

MAX_TILE_COLS = 32768   # ~10 MiB total VMEM @ f32 incl. double buffers
MIN_GRID_STEPS = 4      # keep v7x's 2 TCs and the DMA pipeline busy


def _sigmoid(z):
    # sigmoid(z) == 0.5 * (tanh(z / 2) + 1): a single EUP push per element
    # instead of exp + reciprocal/divide.
    return 0.5 * (jnp.tanh(0.5 * z) + 1.0)


def _mlp_kernel(x_ref, w1_ref, b1_ref, w2_ref, b2_ref, w3_ref, b3_ref, o_ref):
    # Lane-dense: batch is the last (lane) dim of every activation.
    # x_ref: (D_in, tile); o_ref: (D_out, tile); w: (out, in); b: (out, 1).
    x = x_ref[...].astype(jnp.float32)  # compute in f32 (v5e has no bf16 VPU/EUP)
    h1 = _sigmoid(jnp.dot(w1_ref[...], x, preferred_element_type=jnp.float32)
                  + b1_ref[...])                                  # (H1, tile)
    h2 = _sigmoid(jnp.dot(w2_ref[...], h1, preferred_element_type=jnp.float32)
                  + b2_ref[...])                                  # (H2, tile)
    y = _sigmoid(jnp.dot(w3_ref[...], h2, preferred_element_type=jnp.float32)
                 + b3_ref[...])                                   # (D_out, tile)
    o_ref[...] = y.astype(o_ref.dtype)


def _round_up(n, m):
    return ((n + m - 1) // m) * m


def _choose_tile(n, cap):
    """Batch (lane) tile: a multiple of 128 (Pallas masks the ragged last
    block), big enough to amortize the ~0.35us per-grid-step overhead, small
    enough to keep >= MIN_GRID_STEPS steps and stay inside scoped VMEM."""
    if n <= 128:
        return n                                    # single block == full array
    tile = min(cap, (n // 128) * 128)
    if n >= MIN_GRID_STEPS * 128:
        tile = min(tile, _round_up(pl.cdiv(n, MIN_GRID_STEPS), 128))
    return max(tile, 128)


def two_layer_net_forward(x, params, *, out_dtype=jnp.float32,
                          input_transposed=False, output_transposed=False,
                          max_tile_cols=MAX_TILE_COLS):
    """Fused forward pass of TwoLayerNet.

    x: (N, D_in) (or (D_in, N) if input_transposed), f32 or bf16.
    params: w1 (H1, D_in), b1 (H1, 1), w2 (H2, H1), b2 (H2, 1),
            w3 (D_out, H2), b3 (D_out, 1)  -- PyTorch's native Linear layout.
    Returns (N, D_out) (or (D_out, N) if output_transposed).
    """
    if not input_transposed:
        x = x.T                      # layout plumbing only: lane axis = batch
    d_in, n = x.shape
    assert d_in == D_in

    tile = _choose_tile(n, max_tile_cols)
    grid = (pl.cdiv(n, tile),)

    # Weights/biases: block index always (0, 0) -> resident in VMEM, not
    # re-DMA'd every grid step.
    def resident(shape):
        return pl.BlockSpec(shape, lambda i: (0, 0))

    out_itemsize = jnp.dtype(out_dtype).itemsize
    param_bytes = 4 * (D_in * H1 + H1 + H1 * H2 + H2 + H2 * D_out + D_out)
    cost = pl.CostEstimate(
        flops=2 * n * (D_in * H1 + H1 * H2 + H2 * D_out) + n * (H1 + H2 + D_out),
        transcendentals=n * (H1 + H2 + D_out),
        bytes_accessed=n * (D_in * x.dtype.itemsize + D_out * out_itemsize)
        + param_bytes,
    )

    out_t = pl.pallas_call(
        _mlp_kernel,
        out_shape=jax.ShapeDtypeStruct((D_out, n), out_dtype),
        grid=grid,
        in_specs=[
            pl.BlockSpec((D_in, tile), lambda i: (0, i)),  # x^T tiled over lanes
            resident((H1, D_in)), resident((H1, 1)),
            resident((H2, H1)), resident((H2, 1)),
            resident((D_out, H2)), resident((D_out, 1)),
        ],
        out_specs=pl.BlockSpec((D_out, tile), lambda i: (0, i)),
        compiler_params=pltpu.CompilerParams(
            dimension_semantics=("parallel",),   # independent batch tiles
            vmem_limit_bytes=32 * 1024 * 1024,   # headroom; safe on v5e/v6e/v7x
        ),
        cost_estimate=cost,
    )(
        x,
        params["w1"], params["b1"],
        params["w2"], params["b2"],
        params["w3"], params["b3"],
    )
    return out_t if output_transposed else out_t.T


def init_params(key):
    """torch.nn.Linear-style init: U(-1/sqrt(fan_in), 1/sqrt(fan_in)).
    Weights are (out_features, in_features), biases (out_features, 1).
    Values are snapped to bf16-representable f32 so the numerical check in
    __main__ is independent of whichever matmul precision the compiler picks
    (bf16 x bf16 products are exact in f32)."""
    ks = jax.random.split(key, 6)

    def lin(kw, kb, fan_in, fan_out):
        bound = 1.0 / (fan_in ** 0.5)
        snap = lambda a: a.astype(jnp.bfloat16).astype(jnp.float32)
        w = jax.random.uniform(kw, (fan_out, fan_in), jnp.float32, -bound, bound)
        b = jax.random.uniform(kb, (fan_out, 1), jnp.float32, -bound, bound)
        return snap(w), snap(b)

    w1, b1 = lin(ks[0], ks[1], D_in, H1)
    w2, b2 = lin(ks[2], ks[3], H1, H2)
    w3, b3 = lin(ks[4], ks[5], H2, D_out)
    return {"w1": w1, "b1": b1, "w2": w2, "b2": b2, "w3": w3, "b3": b3}


def _ref_forward(x, p):
    h1 = jax.nn.sigmoid(x @ p["w1"].T + p["b1"][:, 0])
    h2 = jax.nn.sigmoid(h1 @ p["w2"].T + p["b2"][:, 0])
    return jax.nn.sigmoid(h2 @ p["w3"].T + p["b3"][:, 0])


if __name__ == "__main__":
    key = jax.random.PRNGKey(0)
    kx, kp = jax.random.split(key)
    params = init_params(kp)

    # Small check (batch=8), exact module semantics. Inputs snapped to bf16
    # grid so the comparison is precision-agnostic (see init_params).
    x_small = jax.random.normal(kx, (8, D_in), jnp.float32)
    x_small = x_small.astype(jnp.bfloat16).astype(jnp.float32)
    y = jax.block_until_ready(two_layer_net_forward(x_small, params))
    y_ref = _ref_forward(x_small, params)
    assert y.shape == (8, D_out)
    assert jnp.allclose(y, y_ref, atol=1e-4, rtol=1e-4), \
        float(jnp.max(jnp.abs(y - y_ref)))

    # Larger, non-128-aligned batch with bf16-stored x: exercises the multi-step
    # grid, the ragged (masked) last block, resident weights, and the halved
    # input-HBM-traffic path.
    x_big = jax.random.normal(kx, (4104, D_in), jnp.float32).astype(jnp.bfloat16)
    y_big = jax.block_until_ready(two_layer_net_forward(x_big, params))
    y_big_ref = _ref_forward(x_big.astype(jnp.float32), params)
    assert y_big.shape == (4104, D_out)
    assert jnp.allclose(y_big, y_big_ref, atol=1e-4, rtol=1e-4), \
        float(jnp.max(jnp.abs(y_big - y_big_ref)))

    print("KERNEL_OK")
</pallas_src>

<mosaic_0001>
module attributes {stable_mosaic.version = 11 : i64} {
  func.func @_mlp_kernel(%arg0: i32, %arg1: memref<4x8xf32, #tpu.memory_space<vmem>>, %arg2: memref<10x4xf32, #tpu.memory_space<vmem>>, %arg3: memref<10x1xf32, #tpu.memory_space<vmem>>, %arg4: memref<5x10xf32, #tpu.memory_space<vmem>>, %arg5: memref<5x1xf32, #tpu.memory_space<vmem>>, %arg6: memref<3x5xf32, #tpu.memory_space<vmem>>, %arg7: memref<3x1xf32, #tpu.memory_space<vmem>>, %arg8: memref<3x8xf32, #tpu.memory_space<vmem>>) attributes {dimension_semantics = [#tpu.dimension_semantics<parallel>], iteration_bounds = array<i64: 1>, scalar_prefetch = 0 : i64, scratch_operands = 0 : i64, tpu.core_type = #tpu.core_type<tc>, window_params = [{transform_indices = @transform_0, window_bounds = array<i64: 4, 8>}, {pipeline_mode = #tpu.pipeline_mode<synchronous>, transform_indices = @transform_1, window_bounds = array<i64: 10, 4>}, {pipeline_mode = #tpu.pipeline_mode<synchronous>, transform_indices = @transform_2, window_bounds = array<i64: 10, 1>}, {pipeline_mode = #tpu.pipeline_mode<synchronous>, transform_indices = @transform_3, window_bounds = array<i64: 5, 10>}, {pipeline_mode = #tpu.pipeline_mode<synchronous>, transform_indices = @transform_4, window_bounds = array<i64: 5, 1>}, {pipeline_mode = #tpu.pipeline_mode<synchronous>, transform_indices = @transform_5, window_bounds = array<i64: 3, 5>}, {pipeline_mode = #tpu.pipeline_mode<synchronous>, transform_indices = @transform_6, window_bounds = array<i64: 3, 1>}, {transform_indices = @transform_7, window_bounds = array<i64: 3, 8>}]} {
    %c0 = arith.constant 0 : index
    %c0_0 = arith.constant 0 : index
    %0 = vector.load %arg1[%c0, %c0_0] : memref<4x8xf32, #tpu.memory_space<vmem>>, vector<4x8xf32>
    %c0_1 = arith.constant 0 : index
    %c0_2 = arith.constant 0 : index
    %1 = vector.load %arg2[%c0_1, %c0_2] : memref<10x4xf32, #tpu.memory_space<vmem>>, vector<10x4xf32>
    %cst = arith.constant dense<0.000000e+00> : vector<10x8xf32>
    %2 = tpu.matmul %1, %0, %cst {dimension_numbers = #tpu.dot_dimension_numbers<[1], [0], [0], [1], [0, 0, 1, 1], [], []>} : vector<10x4xf32>, vector<4x8xf32>, vector<10x8xf32> -> vector<10x8xf32>
    %c0_3 = arith.constant 0 : index
    %c0_4 = arith.constant 0 : index
    %3 = vector.load %arg3[%c0_3, %c0_4] : memref<10x1xf32, #tpu.memory_space<vmem>>, vector<10x1xf32>
    %4 = vector.broadcast %3 : vector<10x1xf32> to vector<10x8xf32>
    %5 = arith.addf %2, %4 : vector<10x8xf32>
    %cst_5 = arith.constant 5.000000e-01 : f32
    %6 = vector.broadcast %cst_5 : f32 to vector<10x8xf32>
    %7 = arith.mulf %6, %5 : vector<10x8xf32>
    %8 = math.tanh %7 : vector<10x8xf32>
    %cst_6 = arith.constant 1.000000e+00 : f32
    %9 = vector.broadcast %cst_6 : f32 to vector<10x8xf32>
    %10 = arith.addf %8, %9 : vector<10x8xf32>
    %cst_7 = arith.constant 5.000000e-01 : f32
    %11 = vector.broadcast %cst_7 : f32 to vector<10x8xf32>
    %12 = arith.mulf %11, %10 : vector<10x8xf32>
    %c0_8 = arith.constant 0 : index
    %c0_9 = arith.constant 0 : index
    %13 = vector.load %arg4[%c0_8, %c0_9] : memref<5x10xf32, #tpu.memory_space<vmem>>, vector<5x10xf32>
    %cst_10 = arith.constant dense<0.000000e+00> : vector<5x8xf32>
    %14 = tpu.matmul %13, %12, %cst_10 {dimension_numbers = #tpu.dot_dimension_numbers<[1], [0], [0], [1], [0, 0, 1, 1], [], []>} : vector<5x10xf32>, vector<10x8xf32>, vector<5x8xf32> -> vector<5x8xf32>
    %c0_11 = arith.constant 0 : index
    %c0_12 = arith.constant 0 : index
    %15 = vector.load %arg5[%c0_11, %c0_12] : memref<5x1xf32, #tpu.memory_space<vmem>>, vector<5x1xf32>
    %16 = vector.broadcast %15 : vector<5x1xf32> to vector<5x8xf32>
    %17 = arith.addf %14, %16 : vector<5x8xf32>
    %cst_13 = arith.constant 5.000000e-01 : f32
    %18 = vector.broadcast %cst_13 : f32 to vector<5x8xf32>
    %19 = arith.mulf %18, %17 : vector<5x8xf32>
    %20 = math.tanh %19 : vector<5x8xf32>
    %cst_14 = arith.constant 1.000000e+00 : f32
    %21 = vector.broadcast %cst_14 : f32 to vector<5x8xf32>
    %22 = arith.addf %20, %21 : vector<5x8xf32>
    %cst_15 = arith.constant 5.000000e-01 : f32
    %23 = vector.broadcast %cst_15 : f32 to vector<5x8xf32>
    %24 = arith.mulf %23, %22 : vector<5x8xf32>
    %c0_16 = arith.constant 0 : index
    %c0_17 = arith.constant 0 : index
    %25 = vector.load %arg6[%c0_16, %c0_17] : memref<3x5xf32, #tpu.memory_space<vmem>>, vector<3x5xf32>
    %cst_18 = arith.constant dense<0.000000e+00> : vector<3x8xf32>
    %26 = tpu.matmul %25, %24, %cst_18 {dimension_numbers = #tpu.dot_dimension_numbers<[1], [0], [0], [1], [0, 0, 1, 1], [], []>} : vector<3x5xf32>, vector<5x8xf32>, vector<3x8xf32> -> vector<3x8xf32>
    %c0_19 = arith.constant 0 : index
    %c0_20 = arith.constant 0 : index
    %27 = vector.load %arg7[%c0_19, %c0_20] : memref<3x1xf32, #tpu.memory_space<vmem>>, vector<3x1xf32>
    %28 = vector.broadcast %27 : vector<3x1xf32> to vector<3x8xf32>
    %29 = arith.addf %26, %28 : vector<3x8xf32>
    %cst_21 = arith.constant 5.000000e-01 : f32
    %30 = vector.broadcast %cst_21 : f32 to vector<3x8xf32>
    %31 = arith.mulf %30, %29 : vector<3x8xf32>
    %32 = math.tanh %31 : vector<3x8xf32>
    %cst_22 = arith.constant 1.000000e+00 : f32
    %33 = vector.broadcast %cst_22 : f32 to vector<3x8xf32>
    %34 = arith.addf %32, %33 : vector<3x8xf32>
    %cst_23 = arith.constant 5.000000e-01 : f32
    %35 = vector.broadcast %cst_23 : f32 to vector<3x8xf32>
    %36 = arith.mulf %35, %34 : vector<3x8xf32>
    %c0_24 = arith.constant 0 : index
    %c0_25 = arith.constant 0 : index
    %37 = vector.load %arg8[%c0_24, %c0_25] : memref<3x8xf32, #tpu.memory_space<vmem>>, vector<3x8xf32>
    tpu.vector_store %arg8[%c0_24, %c0_25], %36 {strides = array<i32>} : memref<3x8xf32, #tpu.memory_space<vmem>>, vector<3x8xf32>,
    return
  }
  func.func @transform_0(%arg0: i32) -> (i32, i32) {
    %c0_i32 = arith.constant 0 : i32
    %c0_i32_0 = arith.constant 0 : i32
    return %c0_i32, %arg0 : i32, i32
  }
  func.func @transform_1(%arg0: i32) -> (i32, i32) {
    %c0_i32 = arith.constant 0 : i32
    %c0_i32_0 = arith.constant 0 : i32
    %c0_i32_1 = arith.constant 0 : i32
    return %c0_i32, %c0_i32_0 : i32, i32
  }
  func.func @transform_2(%arg0: i32) -> (i32, i32) {
    %c0_i32 = arith.constant 0 : i32
    %c0_i32_0 = arith.constant 0 : i32
    %c0_i32_1 = arith.constant 0 : i32
    return %c0_i32, %c0_i32_0 : i32, i32
  }
  func.func @transform_3(%arg0: i32) -> (i32, i32) {
    %c0_i32 = arith.constant 0 : i32
    %c0_i32_0 = arith.constant 0 : i32
    %c0_i32_1 = arith.constant 0 : i32
    return %c0_i32, %c0_i32_0 : i32, i32
  }
  func.func @transform_4(%arg0: i32) -> (i32, i32) {
    %c0_i32 = arith.constant 0 : i32
    %c0_i32_0 = arith.constant 0 : i32
    %c0_i32_1 = arith.constant 0 : i32
    return %c0_i32, %c0_i32_0 : i32, i32
  }
  func.func @transform_5(%arg0: i32) -> (i32, i32) {
    %c0_i32 = arith.constant 0 : i32
    %c0_i32_0 = arith.constant 0 : i32
    %c0_i32_1 = arith.constant 0 : i32
    return %c0_i32, %c0_i32_0 : i32, i32
  }
  func.func @transform_6(%arg0: i32) -> (i32, i32) {
    %c0_i32 = arith.constant 0 : i32
    %c0_i32_0 = arith.constant 0 : i32
    %c0_i32_1 = arith.constant 0 : i32
    return %c0_i32, %c0_i32_0 : i32, i32
  }
  func.func @transform_7(%arg0: i32) -> (i32, i32) {
    %c0_i32 = arith.constant 0 : i32
    %c0_i32_0 = arith.constant 0 : i32
    return %c0_i32, %arg0 : i32, i32
  }
}

</mosaic_0001>

<llo_original>
// kernel: tpu_custom_call.1
$region0: #{tpu_custom_call.1}
  #allocation0 [shape = 'u32[]', space=smem, size = 0x4, offset = 0x4, fixed_abs, tag = 'smem constant byte address 0x4 - core index']
  #allocation1 [shape = 'u32[144,128]{1,0:T(1,128)}', space=vmem, size = 0x12000, scoped, tag = 'internal scratch']
  %s0 = inlined_call_operand.vmem [shape: f32[4,8], index: 0, kind: input, shape index: {}]
  %s1 = inlined_call_operand.vmem [shape: f32[10,4], index: 1, kind: input, shape index: {}]
  %s2 = inlined_call_operand.vmem [shape: f32[10,1], index: 2, kind: input, shape index: {}]
  %s3 = inlined_call_operand.vmem [shape: f32[5,10], index: 3, kind: input, shape index: {}]
  %s4 = inlined_call_operand.vmem [shape: f32[5,1], index: 4, kind: input, shape index: {}]
  %s5 = inlined_call_operand.vmem [shape: f32[3,5], index: 5, kind: input, shape index: {}]
  %s6 = inlined_call_operand.vmem [shape: f32[3,1], index: 6, kind: input, shape index: {}]
  %s7 = inlined_call_operand.hbm [shape: f32[3,8], index: 7, kind: output, shape index: {}]
  %s8 = sld [smem:[#allocation0]]
  $region38: #{tpu_custom_call.1} parent=0
    _
  %s10 = ssub.s32 1, %s8
  %s11 = scalar_select 0, %s10, %s8
  $region1: #{tpu_custom_call.1} parent=0
    #allocation2 [shape = 'u8[2048]{0}', space=vmem, size = 0x800, scoped, tag = 'output window, operand 0, single buffered']
    #allocation3 [shape = 's32[1]{0}', space=sflag, size = 0x4, scoped, tag = 'scoped memory for tpu_custom_call.1']
    %12 = vsyncpa [#allocation3], 0
    // Predicated region
    $region2: #{tpu_custom_call.1} parent=1 // pred_check
      _
    $region3: #{tpu_custom_call.1} parent=1 // pred_check_branch
      %14 = sbr.rel (0) target = $region5
    $region4: #{tpu_custom_call.1} parent=1 // pred_region
      _
    $region5: #{tpu_custom_call.1} parent=1 // pred_fallthru
      _
    // Predicated region
    $region6: #{tpu_custom_call.1} parent=1 // pred_check
      _
    $region7: #{tpu_custom_call.1} parent=1 // pred_check_branch
      %16 = sbr.rel (0) target = $region9
    $region8: #{tpu_custom_call.1} parent=1 // pred_region
      _
    $region9: #{tpu_custom_call.1} parent=1 // pred_fallthru
      _
    // Predicated region
    $region10: #{tpu_custom_call.1} parent=1 // pred_check
      _
    $region11: #{tpu_custom_call.1} parent=1 // pred_check_branch
      %18 = sbr.rel (0) target = $region13
    $region12: #{tpu_custom_call.1} parent=1 // pred_region
      _
    $region13: #{tpu_custom_call.1} parent=1 // pred_fallthru
      _
    // Predicated region
    $region14: #{tpu_custom_call.1} parent=1 // pred_check
      _
    $region15: #{tpu_custom_call.1} parent=1 // pred_check_branch
      %20 = sbr.rel (0) target = $region17
    $region16: #{tpu_custom_call.1} parent=1 // pred_region
      _
    $region17: #{tpu_custom_call.1} parent=1 // pred_fallthru
      _
    // Predicated region
    $region18: #{tpu_custom_call.1} parent=1 // pred_check
      _
    $region19: #{tpu_custom_call.1} parent=1 // pred_check_branch
      %22 = sbr.rel (0) target = $region21
    $region20: #{tpu_custom_call.1} parent=1 // pred_region
      _
    $region21: #{tpu_custom_call.1} parent=1 // pred_fallthru
      _
    // Predicated region
    $region22: #{tpu_custom_call.1} parent=1 // pred_check
      _
    $region23: #{tpu_custom_call.1} parent=1 // pred_check_branch
      %24 = sbr.rel (0) target = $region25
    $region24: #{tpu_custom_call.1} parent=1 // pred_region
      _
    $region25: #{tpu_custom_call.1} parent=1 // pred_fallthru
      _
    // Predicated region
    $region26: #{tpu_custom_call.1} parent=1 // pred_check
      _
    $region27: #{tpu_custom_call.1} parent=1 // pred_check_branch
      %26 = sbr.rel (0) target = $region29
    $region28: #{tpu_custom_call.1} parent=1 // pred_region
      _
    $region29: #{tpu_custom_call.1} parent=1 // pred_fallthru
      _
    %v27 = vld [vmem:[%s0] sm:$0xf]
    %v28 = vld [vmem:[%s1] sm:$0xff]
    %v29 = vld [vmem:[%s1 + $0x8] sm:$0x3]
    %v30 = vld [vmem:[%s2] sm:$0xff]
    %v31 = vld [vmem:[%s2 + $0x8] sm:$0x3]
    %33 = vset.pattern.permute.xlu0 0
    %34 = vperm.xlu0 %33, %v30
    %v35 = vpop.permute.xlu0 %34
    %38 = vset.pattern.permute.xlu0 0
    %39 = vperm.xlu0 %38, %v31
    %v40 = vpop.permute.xlu0 %39
    %vm42 = vcmask 31744
    %v44 = vsel %vm42, %v28, 0
    %v47 = vsel %vm42, %v29, 0
    %vm49 = vcmask 1043456
    %v51 = vsel %vm49, %v27, 0
    %53 = vmatprep.subr.mxu0 0.0
    %54 = vmatpush1.msra.mxu0 %v51
    %55 = vmatprep.subr.mxu0 0.0
    %56 = vmatpush1.msra.mxu0 0.0
    %57 = vmatprep.subr.mxu0 0.0
    %58 = vmatpush1.msra.mxu0 0.0
    %59 = vmatprep.subr.mxu0 0.0
    %60 = vmatpush1.msra.mxu0 0.0
    %61 = vmatprep.subr.mxu0 0.0
    %62 = vmatpush1.msra.mxu0 0.0
    %63 = vmatprep.subr.mxu0 0.0
    %64 = vmatpush1.msra.mxu0 0.0
    %65 = vmatprep.subr.mxu0 0.0
    %66 = vmatpush1.msra.mxu0 0.0
    %67 = vmatprep.subr.mxu0 0.0
    %68 = vmatpush1.msra.mxu0 0.0
    %69 = vmatprep.subr.mxu0 0.0
    %70 = vmatpush1.msra.mxu0 0.0
    %71 = vmatprep.subr.mxu0 0.0
    %72 = vmatpush1.msra.mxu0 0.0
    %73 = vmatprep.subr.mxu0 0.0
    %74 = vmatpush1.msra.mxu0 0.0
    %75 = vmatprep.subr.mxu0 0.0
    %76 = vmatpush1.msra.mxu0 0.0
    %77 = vmatprep.subr.mxu0 0.0
    %78 = vmatpush1.msra.mxu0 0.0
    %79 = vmatprep.subr.mxu0 0.0
    %80 = vmatpush1.msra.mxu0 0.0
    %81 = vmatprep.subr.mxu0 0.0
    %82 = vmatpush1.msra.mxu0 0.0
    %83 = vmatprep.subr.mxu0 0.0
    %84 = vmatpush1.msra.mxu0 0.0
    %85 = vmatprep.subr.mxu0 0.0
    %86 = vmatpush1.msra.mxu0 0.0
    %87 = vmatprep.subr.mxu0 0.0
    %88 = vmatpush1.msra.mxu0 0.0
    %89 = vmatprep.subr.mxu0 0.0
    %90 = vmatpush1.msra.mxu0 0.0
    %91 = vmatprep.subr.mxu0 0.0
    %92 = vmatpush1.msra.mxu0 0.0
    %93 = vmatprep.subr.mxu0 0.0
    %94 = vmatpush1.msra.mxu0 0.0
    %95 = vmatprep.subr.mxu0 0.0
    %96 = vmatpush1.msra.mxu0 0.0
    %97 = vmatprep.subr.mxu0 0.0
    %98 = vmatpush1.msra.mxu0 0.0
    %99 = vmatprep.subr.mxu0 0.0
    %100 = vmatpush1.msra.mxu0 0.0
    %101 = vmatprep.subr.mxu0 0.0
    %102 = vmatpush1.msra.mxu0 0.0
    %103 = vmatprep.subr.mxu0 0.0
    %104 = vmatpush1.msra.mxu0 0.0
    %105 = vmatprep.subr.mxu0 0.0
    %106 = vmatpush1.msra.mxu0 0.0
    %107 = vmatprep.subr.mxu0 0.0
    %108 = vmatpush1.msra.mxu0 0.0
    %109 = vmatprep.subr.mxu0 0.0
    %110 = vmatpush1.msra.mxu0 0.0
    %111 = vmatprep.subr.mxu0 0.0
    %112 = vmatpush1.msra.mxu0 0.0
    %113 = vmatprep.subr.mxu0 0.0
    %114 = vmatpush1.msra.mxu0 0.0
    %115 = vmatprep.subr.mxu0 0.0
    %116 = vmatpush1.msra.mxu0 0.0
    %117 = vmatprep.mubr.f32.mxu0 0.0
    %118 = vmatmul.mubr.f32.gmra.mrb[0].mxu0 %v44
    %v119 = vpop.f32.mrb[0].mxu0
    %v120 = vadd.f32 %v35, %v119
    %v121 = vpop.f32.mrb[0].mxu0
    %122 = vmatprep.mubr.f32.mxu0 0.0
    %123 = vmatmul.mubr.f32.gmra.mrb[0].mxu0 %v47
    %v124 = vpop.f32.mrb[0].mxu0
    %v125 = vadd.f32 %v40, %v124
    %v126 = vpop.f32.mrb[0].mxu0
    %127 = vdwg.mxu0
    %v128 = vmul.f32 %v120, 0.5
    %v129 = vmul.f32 %v125, 0.5
    %v130 = vtanh.pop %v128
    %v131 = vtanh.pop %v129
    %v132 = vadd.f32 %v130, 1.0
    %v133 = vadd.f32 %v131, 1.0
    %v134 = vmul.f32 %v132, 0.5
    %v135 = vmul.f32 %v133, 0.5
    %v136 = vld [vmem:[%s3] sm:$0x1f]
    %v137 = vld [vmem:[%s4] sm:$0x1f]
    %139 = vset.pattern.permute.xlu0 0
    %140 = vperm.xlu0 %139, %v137
    %v141 = vpop.permute.xlu0 %140
    %vm143 = vcmask 80896
    %v145 = vsel %vm143, %v136, 0
    %vm147 = vcmask 1041408
    %v149 = vsel %vm147, %v135, 0
    %151 = vmatprep.subr.mxu0 0.0
    %152 = vmatpush1.msra.mxu0 %v134
    %153 = vmatprep.subr.mxu0 0.0
    %154 = vmatpush1.msra.mxu0 %v149
    %155 = vmatprep.subr.mxu0 0.0
    %156 = vmatpush1.msra.mxu0 0.0
    %157 = vmatprep.subr.mxu0 0.0
    %158 = vmatpush1.msra.mxu0 0.0
    %159 = vmatprep.subr.mxu0 0.0
    %160 = vmatpush1.msra.mxu0 0.0
    %161 = vmatprep.subr.mxu0 0.0
    %162 = vmatpush1.msra.mxu0 0.0
    %163 = vmatprep.subr.mxu0 0.0
    %164 = vmatpush1.msra.mxu0 0.0
    %165 = vmatprep.subr.mxu0 0.0
    %166 = vmatpush1.msra.mxu0 0.0
    %167 = vmatprep.subr.mxu0 0.0
    %168 = vmatpush1.msra.mxu0 0.0
    %169 = vmatprep.subr.mxu0 0.0
    %170 = vmatpush1.msra.mxu0 0.0
    %171 = vmatprep.subr.mxu0 0.0
    %172 = vmatpush1.msra.mxu0 0.0
    %173 = vmatprep.subr.mxu0 0.0
    %174 = vmatpush1.msra.mxu0 0.0
    %175 = vmatprep.subr.mxu0 0.0
    %176 = vmatpush1.msra.mxu0 0.0
    %177 = vmatprep.subr.mxu0 0.0
    %178 = vmatpush1.msra.mxu0 0.0
    %179 = vmatprep.subr.mxu0 0.0
    %180 = vmatpush1.msra.mxu0 0.0
    %181 = vmatprep.subr.mxu0 0.0
    %182 = vmatpush1.msra.mxu0 0.0
    %183 = vmatprep.subr.mxu0 0.0
    %184 = vmatpush1.msra.mxu0 0.0
    %185 = vmatprep.subr.mxu0 0.0
    %186 = vmatpush1.msra.mxu0 0.0
    %187 = vmatprep.subr.mxu0 0.0
    %188 = vmatpush1.msra.mxu0 0.0
    %189 = vmatprep.subr.mxu0 0.0
    %190 = vmatpush1.msra.mxu0 0.0
    %191 = vmatprep.subr.mxu0 0.0
    %192 = vmatpush1.msra.mxu0 0.0
    %193 = vmatprep.subr.mxu0 0.0
    %194 = vmatpush1.msra.mxu0 0.0
    %195 = vmatprep.subr.mxu0 0.0
    %196 = vmatpush1.msra.mxu0 0.0
    %197 = vmatprep.subr.mxu0 0.0
    %198 = vmatpush1.msra.mxu0 0.0
    %199 = vmatprep.subr.mxu0 0.0
    %200 = vmatpush1.msra.mxu0 0.0
    %201 = vmatprep.subr.mxu0 0.0
    %202 = vmatpush1.msra.mxu0 0.0
    %203 = vmatprep.subr.mxu0 0.0
    %204 = vmatpush1.msra.mxu0 0.0
    %205 = vmatprep.subr.mxu0 0.0
    %206 = vmatpush1.msra.mxu0 0.0
    %207 = vmatprep.subr.mxu0 0.0
    %208 = vmatpush1.msra.mxu0 0.0
    %209 = vmatprep.subr.mxu0 0.0
    %210 = vmatpush1.msra.mxu0 0.0
    %211 = vmatprep.subr.mxu0 0.0
    %212 = vmatpush1.msra.mxu0 0.0
    %213 = vmatprep.subr.mxu0 0.0
    %214 = vmatpush1.msra.mxu0 0.0
    %215 = vmatprep.mubr.f32.mxu0 0.0
    %216 = vmatmul.mubr.f32.gmra.mrb[0].mxu0 %v145
    %v217 = vpop.f32.mrb[0].mxu0
    %v218 = vadd.f32 %v141, %v217
    %v219 = vpop.f32.mrb[0].mxu0
    %220 = vdwg.mxu0
    %v221 = vmul.f32 %v218, 0.5
    %v222 = vtanh.pop %v221
    %v223 = vadd.f32 %v222, 1.0
    %v224 = vmul.f32 %v223, 0.5
    %v225 = vld [vmem:[%s5] sm:$0x7]
    %v226 = vld [vmem:[%s6] sm:$0x7]
    %228 = vset.pattern.permute.xlu0 0
    %229 = vperm.xlu0 %228, %v226
    %v230 = vpop.permute.xlu0 %229
    %vm232 = vcmask 39936
    %v234 = vsel %vm232, %v225, 0
    %vm236 = vcmask 1044480
    %v238 = vsel %vm236, %v224, 0
    %240 = vmatprep.subr.mxu0 0.0
    %241 = vmatpush1.msra.mxu0 %v238
    %242 = vmatprep.subr.mxu0 0.0
    %243 = vmatpush1.msra.mxu0 0.0
    %244 = vmatprep.subr.mxu0 0.0
    %245 = vmatpush1.msra.mxu0 0.0
    %246 = vmatprep.subr.mxu0 0.0
    %247 = vmatpush1.msra.mxu0 0.0
    %248 = vmatprep.subr.mxu0 0.0
    %249 = vmatpush1.msra.mxu0 0.0
    %250 = vmatprep.subr.mxu0 0.0
    %251 = vmatpush1.msra.mxu0 0.0
    %252 = vmatprep.subr.mxu0 0.0
    %253 = vmatpush1.msra.mxu0 0.0
    %254 = vmatprep.subr.mxu0 0.0
    %255 = vmatpush1.msra.mxu0 0.0
    %256 = vmatprep.subr.mxu0 0.0
    %257 = vmatpush1.msra.mxu0 0.0
    %258 = vmatprep.subr.mxu0 0.0
    %259 = vmatpush1.msra.mxu0 0.0
    %260 = vmatprep.subr.mxu0 0.0
    %261 = vmatpush1.msra.mxu0 0.0
    %262 = vmatprep.subr.mxu0 0.0
    %263 = vmatpush1.msra.mxu0 0.0
    %264 = vmatprep.subr.mxu0 0.0
    %265 = vmatpush1.msra.mxu0 0.0
    %266 = vmatprep.subr.mxu0 0.0
    %267 = vmatpush1.msra.mxu0 0.0
    %268 = vmatprep.subr.mxu0 0.0
    %269 = vmatpush1.msra.mxu0 0.0
    %270 = vmatprep.subr.mxu0 0.0
    %271 = vmatpush1.msra.mxu0 0.0
    %272 = vmatprep.subr.mxu0 0.0
    %273 = vmatpush1.msra.mxu0 0.0
    %274 = vmatprep.subr.mxu0 0.0
    %275 = vmatpush1.msra.mxu0 0.0
    %276 = vmatprep.subr.mxu0 0.0
    %277 = vmatpush1.msra.mxu0 0.0
    %278 = vmatprep.subr.mxu0 0.0
    %279 = vmatpush1.msra.mxu0 0.0
    %280 = vmatprep.subr.mxu0 0.0
    %281 = vmatpush1.msra.mxu0 0.0
    %282 = vmatprep.subr.mxu0 0.0
    %283 = vmatpush1.msra.mxu0 0.0
    %284 = vmatprep.subr.mxu0 0.0
    %285 = vmatpush1.msra.mxu0 0.0
    %286 = vmatprep.subr.mxu0 0.0
    %287 = vmatpush1.msra.mxu0 0.0
    %288 = vmatprep.subr.mxu0 0.0
    %289 = vmatpush1.msra.mxu0 0.0
    %290 = vmatprep.subr.mxu0 0.0
    %291 = vmatpush1.msra.mxu0 0.0
    %292 = vmatprep.subr.mxu0 0.0
    %293 = vmatpush1.msra.mxu0 0.0
    %294 = vmatprep.subr.mxu0 0.0
    %295 = vmatpush1.msra.mxu0 0.0
    %296 = vmatprep.subr.mxu0 0.0
    %297 = vmatpush1.msra.mxu0 0.0
    %298 = vmatprep.subr.mxu0 0.0
    %299 = vmatpush1.msra.mxu0 0.0
    %300 = vmatprep.subr.mxu0 0.0
    %301 = vmatpush1.msra.mxu0 0.0
    %302 = vmatprep.subr.mxu0 0.0
    %303 = vmatpush1.msra.mxu0 0.0
    %304 = vmatprep.mubr.f32.mxu0 0.0
    %305 = vmatmul.mubr.f32.gmra.mrb[0].mxu0 %v234
    %v306 = vpop.f32.mrb[0].mxu0
    %v307 = vadd.f32 %v230, %v306
    %v308 = vpop.f32.mrb[0].mxu0
    %309 = vdwg.mxu0
    %v310 = vmul.f32 %v307, 0.5
    %v311 = vtanh.pop %v310
    %v312 = vadd.f32 %v311, 1.0
    %v313 = vmul.f32 %v312, 0.5
    %vm314 = vcmask 59392
    %315 = vst.msk [vmem:[#allocation2] sm:$0x7] %vm314, %v313
    // Predicated region
    $region30: #{tpu_custom_call.1} parent=1 // pred_check
      _
    $region31: #{tpu_custom_call.1} parent=1 // pred_check_branch
      %317 = sbr.rel (0) target = $region33
    $region32: #{tpu_custom_call.1} parent=1 // pred_region
      %s319 = ssub.s32 64, 64
      %320 = vsyncadd [#allocation3], %s319
      %s322 = sshll.u32 [#allocation2], 4
      %s323 = int_to_ptr.vmem [resolvable:$true] %s322
      %325 = dma.vmem_to_hbm [thread:$0]  %s323, 64, %s7, [#allocation3]
    $region33: #{tpu_custom_call.1} parent=1 // pred_fallthru
      _
    // Predicated region
    $region34: #{tpu_custom_call.1} parent=1 // pred_check
      _
    $region35: #{tpu_custom_call.1} parent=1 // pred_check_branch
      %327 = sbr.rel (0) target = $region37
    $region36: #{tpu_custom_call.1} parent=1 // pred_region
      %328 = dma.done [#allocation3], 64
    $region37: #{tpu_custom_call.1} parent=1 // pred_fallthru
      _
    %329 = vsyncpa [#allocation3], 1

</llo_original>
